<compile_context>
chip_gen: v6e
topology: v6e:2x2x1
jax: 0.10.0
libtpu: 0.0.40
codegen_flags: <defaults>
</compile_context>

<pallas_src>
import functools

import jax
import jax.numpy as jnp
from jax import lax
from jax.experimental import pallas as pl
from jax.experimental.pallas import tpu as pltpu


def _infoce_kernel(rows_ref, loss_ref, col_max_ref, col_sum_ref, acc_ref, *,
                   inv_temperature, block_rows, single_tile, use_mxu):
    i = pl.program_id(0)
    last = pl.num_programs(0) - 1

    @pl.when(i == 0)
    def _init():
        col_max_ref[...] = jnp.full(col_max_ref.shape, -jnp.inf, dtype=jnp.float32)
        col_sum_ref[...] = jnp.zeros(col_sum_ref.shape, dtype=jnp.float32)
        acc_ref[0] = jnp.float32(0.0)

    # ---- load + temperature scale (f32 math in VMEM; bf16 HBM input ok) ----
    x = rows_ref[...].astype(jnp.float32) * inv_temperature           # (TM, b)

    # ---- row-direction CE: per-row logsumexp --------------------------------
    m_row = jnp.max(x, axis=1, keepdims=True)                         # (TM, 1)
    e_row = jnp.exp(x - m_row)                                        # (TM, b)
    lse_row = m_row + jnp.log(jnp.sum(e_row, axis=1, keepdims=True))  # (TM, 1)

    # ---- column-direction CE: hardened online logsumexp across row tiles ----
    tile_col_max = jnp.max(x, axis=0, keepdims=True)                  # (1, b)
    e_col = jnp.exp(x - tile_col_max)                                 # (TM, b)
    if use_mxu:
        # Column sum on the MXU: ones(8, TM) @ e_col (all result rows identical,
        # identical vmatmul count to an M=1 matmul, but tile-friendly shapes).
        ones_lhs = jnp.ones((8, block_rows), dtype=jnp.float32)
        col_part = jnp.dot(ones_lhs, e_col,
                           preferred_element_type=jnp.float32)[0:1, :]  # (1, b)
    else:
        col_part = jnp.sum(e_col, axis=0, keepdims=True)              # (1, b)

    new_col_max = jnp.maximum(col_max_ref[...], tile_col_max)         # (1, b)
    # Both rescale factors are exp(<= 0) <= 1: exact, no clamp, no overflow.
    col_sum_ref[...] = (col_sum_ref[...] * jnp.exp(col_max_ref[...] - new_col_max)
                        + col_part * jnp.exp(tile_col_max - new_col_max))
    col_max_ref[...] = new_col_max

    # ---- diagonal: trace of the (TM, TM) block at columns [i*TM, (i+1)*TM) --
    if single_tile:
        d = x                                    # already scaled, whole matrix
        diag_scale = jnp.float32(1.0)
    else:
        # block_rows % 128 == 0 here, so the dynamic lane offset is 128-aligned.
        col_start = pl.multiple_of(i * block_rows, 128)
        d = rows_ref[:, pl.ds(col_start, block_rows)].astype(jnp.float32)
        diag_scale = jnp.float32(inv_temperature)   # scale the scalar, not TM^2 elems
    rr = lax.broadcasted_iota(jnp.int32, (block_rows, block_rows), 0)
    cc = lax.broadcasted_iota(jnp.int32, (block_rows, block_rows), 1)
    diag_sum = jnp.sum(jnp.where(rr == cc, d, jnp.float32(0.0)),
                       keepdims=True) * diag_scale                    # (1, 1)

    # ---- per-tile scalar accumulation in SMEM --------------------------------
    tile_term = 0.5 * jnp.sum(lse_row, keepdims=True) - diag_sum      # (1, 1)
    acc_ref[0] += tile_term[0, 0]

    @pl.when(i == last)
    def _finalize():
        lse_col = col_max_ref[...] + jnp.log(col_sum_ref[...])        # (1, b)
        loss_ref[0, 0] = acc_ref[0] + 0.5 * jnp.sum(lse_col, keepdims=True)[0, 0]


def _vmem_capacity_bytes():
    """Per-core VMEM capacity; conservative fallback if the query is unavailable."""
    try:
        info = pltpu.get_tpu_info()
        cap = int(getattr(info, "vmem_capacity_bytes", 0) or 0)
        if cap > 0:
            return cap
    except Exception:
        pass
    return 64 << 20   # v7x per-TensorCore VMEM (most restrictive generation)


def _vmem_tile_estimate(tm, b, itemsize):
    # double-buffered input slab + f32 temporaries (x, e_row, e_col)
    # + diag block + column scratch.
    return (2 * tm * b * itemsize + 3 * tm * b * 4 + tm * tm * 4 + 4 * b * 4)


def _pick_block_rows(b, itemsize, vmem_capacity):
    """Largest lane-aligned row tile that divides b and fits ~half of VMEM."""
    if b <= 512:
        return b                                   # single tile, block == array
    budget = vmem_capacity // 2                    # ~32 MiB on v7x, ~64 MiB on v5e/v6e
    for tm in (1024, 512, 384, 256, 128):
        if b % tm == 0 and _vmem_tile_estimate(tm, b, itemsize) <= budget:
            return tm
    if b % 128 != 0 and _vmem_tile_estimate(b, b, itemsize) <= budget:
        return b                                   # small-ish odd b: single tile
    raise ValueError(
        f"InfoCE Pallas kernel: no row tile fits VMEM for b={b} "
        "(need b % 128 == 0 and a (TM, b) slab within ~half of VMEM). "
        "TODO(synk): add flash-style 2-D (row, col) tiling for very large b.")


def infoce_loss(logits, temperature_const=1.0, block_rows=None):
    """InfoCE loss on a (b, b) logits matrix. Returns (loss, None)."""
    b, b2 = logits.shape
    assert b == b2, "logits must be square (b, b)"

    itemsize = jnp.dtype(logits.dtype).itemsize
    vmem_cap = _vmem_capacity_bytes()
    if block_rows is None:
        block_rows = _pick_block_rows(b, itemsize, vmem_cap)
    assert b % block_rows == 0, "block_rows must divide b"
    assert block_rows == b or block_rows % 128 == 0, (
        "block_rows must be a multiple of 128 (aligned diag slice) or == b")

    n_tiles = b // block_rows
    single_tile = (n_tiles == 1)
    use_mxu = block_rows >= 128

    kernel = functools.partial(
        _infoce_kernel,
        inv_temperature=1.0 / float(temperature_const),
        block_rows=block_rows,
        single_tile=single_tile,
        use_mxu=use_mxu)

    vmem_bytes = _vmem_tile_estimate(block_rows, b, itemsize) + (4 << 20)
    vmem_bytes = int(min(max(vmem_bytes, 16 << 20), int(vmem_cap * 0.9)))

    loss = pl.pallas_call(
        kernel,
        out_shape=jax.ShapeDtypeStruct((1, 1), jnp.float32),
        grid=(n_tiles,),
        in_specs=[
            # Full-width row slab for tile i (single HBM stream, double-buffered).
            pl.BlockSpec((block_rows, b), lambda i: (i, 0)),
        ],
        out_specs=pl.BlockSpec(memory_space=pltpu.SMEM),   # resident scalar
        scratch_shapes=[
            pltpu.VMEM((1, b), jnp.float32),   # running column max
            pltpu.VMEM((1, b), jnp.float32),   # running column exp-sum
            pltpu.SMEM((1,), jnp.float32),     # 0.5*sum(lse_row) - sum(diag)
        ],
        compiler_params=pltpu.CompilerParams(
            dimension_semantics=("arbitrary",),   # grid axis carries accumulators
            vmem_limit_bytes=vmem_bytes,
        ),
    )(logits)

    return loss[0, 0], None


def _reference(logits, temperature_const):
    x = logits.astype(jnp.float32) / temperature_const
    lse_r = jax.scipy.special.logsumexp(x, axis=1)
    lse_c = jax.scipy.special.logsumexp(x, axis=0)
    diag = jnp.diagonal(x)
    return 0.5 * (jnp.sum(lse_r - diag) + jnp.sum(lse_c - diag))


if __name__ == "__main__":
    key = jax.random.PRNGKey(0)
    k1, k2 = jax.random.split(key)

    # 1) Small single-tile case (b = 8): block == full array, VPU-only path.
    b1 = 8
    logits1 = jax.random.normal(k1, (b1, b1), dtype=jnp.float32)
    loss1, _ = infoce_loss(logits1, temperature_const=0.5)
    loss1 = jax.block_until_ready(loss1)
    ref1 = _reference(logits1, 0.5)
    assert jnp.allclose(loss1, ref1, rtol=1e-5, atol=1e-4), (loss1, ref1)

    # 2) Multi-tile case (b = 256, TM = 128): online column LSE, MXU column sum,
    #    diag sliced out of the resident slab at a dynamic 128-aligned offset.
    b2 = 256
    logits2 = jax.random.normal(k2, (b2, b2), dtype=jnp.float32) * 3.0
    loss2, _ = infoce_loss(logits2, temperature_const=1.0, block_rows=128)
    loss2 = jax.block_until_ready(loss2)
    ref2 = _reference(logits2, 1.0)
    assert jnp.allclose(loss2, ref2, rtol=1e-5, atol=1e-3), (loss2, ref2)

    # 3) Small temperature (large dynamic range): exercises the hardened online
    #    column logsumexp (the old rescale trick would underflow/clamp here).
    loss3, _ = infoce_loss(logits2, temperature_const=0.05, block_rows=128)
    loss3 = jax.block_until_ready(loss3)
    ref3 = _reference(logits2, 0.05)
    assert jnp.allclose(loss3, ref3, rtol=1e-5, atol=1e-2), (loss3, ref3)

    # 4) bf16 logits at the boundary (half the HBM DMA bytes; f32 math in VMEM).
    logits4 = logits2.astype(jnp.bfloat16)
    loss4, _ = infoce_loss(logits4, temperature_const=1.0, block_rows=128)
    loss4 = jax.block_until_ready(loss4)
    ref4 = _reference(logits4.astype(jnp.float32), 1.0)
    assert jnp.allclose(loss4, ref4, rtol=1e-4, atol=1e-2), (loss4, ref4)

    print("KERNEL_OK")
</pallas_src>

<mosaic_0001>
module attributes {stable_mosaic.version = 11 : i64} {
  func.func @_infoce_kernel(%arg0: i32, %arg1: memref<8x8xf32, #tpu.memory_space<vmem>>, %arg2: memref<1x1xf32, #tpu.memory_space<smem>>, %arg3: memref<1x8xf32, #tpu.memory_space<vmem>>, %arg4: memref<1x8xf32, #tpu.memory_space<vmem>>, %arg5: memref<1xf32, #tpu.memory_space<smem>>) attributes {dimension_semantics = [#tpu.dimension_semantics<arbitrary>], iteration_bounds = array<i64: 1>, scalar_prefetch = 0 : i64, scratch_operands = 3 : i64, tpu.core_type = #tpu.core_type<tc>, window_params = [{transform_indices = @transform_0, window_bounds = array<i64: 8, 8>}, {transform_indices = @transform_1, window_bounds = array<i64: 1, 1>}]} {
    %c0_i32 = arith.constant 0 : i32
    %0 = arith.cmpi eq, %arg0, %c0_i32 : i32
    %1 = arith.extui %0 : i1 to i32
    %c0_i32_0 = arith.constant 0 : i32
    %2 = arith.cmpi ne, %1, %c0_i32_0 : i32
    scf.if %2 {
      %cst_25 = arith.constant 0xFF800000 : f32
      %62 = vector.broadcast %cst_25 : f32 to vector<1x8xf32>
      %c0_26 = arith.constant 0 : index
      %c0_27 = arith.constant 0 : index
      %63 = vector.load %arg3[%c0_26, %c0_27] : memref<1x8xf32, #tpu.memory_space<vmem>>, vector<1x8xf32>
      tpu.vector_store %arg3[%c0_26, %c0_27], %62 {strides = array<i32>} : memref<1x8xf32, #tpu.memory_space<vmem>>, vector<1x8xf32>,
      %cst_28 = arith.constant 0.000000e+00 : f32
      %64 = vector.broadcast %cst_28 : f32 to vector<1x8xf32>
      %c0_29 = arith.constant 0 : index
      %c0_30 = arith.constant 0 : index
      %65 = vector.load %arg4[%c0_29, %c0_30] : memref<1x8xf32, #tpu.memory_space<vmem>>, vector<1x8xf32>
      tpu.vector_store %arg4[%c0_29, %c0_30], %64 {strides = array<i32>} : memref<1x8xf32, #tpu.memory_space<vmem>>, vector<1x8xf32>,
      %cst_31 = arith.constant 0.000000e+00 : f32
      %c0_32 = arith.constant 0 : index
      %66 = memref.load %arg5[%c0_32] : memref<1xf32, #tpu.memory_space<smem>>
      memref.store %cst_31, %arg5[%c0_32] : memref<1xf32, #tpu.memory_space<smem>>
    } else {
    }
    %c0 = arith.constant 0 : index
    %c0_1 = arith.constant 0 : index
    %3 = vector.load %arg1[%c0, %c0_1] : memref<8x8xf32, #tpu.memory_space<vmem>>, vector<8x8xf32>
    %cst = arith.constant 2.000000e+00 : f32
    %4 = vector.broadcast %cst : f32 to vector<8x8xf32>
    %5 = arith.mulf %3, %4 : vector<8x8xf32>
    %cst_2 = arith.constant dense<0xFF800000> : vector<8xf32>
    %6 = vector.multi_reduction <maximumf>, %5, %cst_2 [1] : vector<8x8xf32> to vector<8xf32>
    %7 = vector.shape_cast %6 : vector<8xf32> to vector<8x1xf32>
    %8 = vector.broadcast %7 : vector<8x1xf32> to vector<8x8xf32>
    %9 = arith.subf %5, %8 : vector<8x8xf32>
    %10 = math.exp %9 : vector<8x8xf32>
    %cst_3 = arith.constant dense<0.000000e+00> : vector<8xf32>
    %11 = vector.multi_reduction <add>, %10, %cst_3 [1] : vector<8x8xf32> to vector<8xf32>
    %12 = vector.shape_cast %11 : vector<8xf32> to vector<8x1xf32>
    %13 = math.log %12 : vector<8x1xf32>
    %14 = arith.addf %7, %13 : vector<8x1xf32>
    %cst_4 = arith.constant dense<0xFF800000> : vector<8xf32>
    %15 = vector.multi_reduction <maximumf>, %5, %cst_4 [0] : vector<8x8xf32> to vector<8xf32>
    %16 = vector.shape_cast %15 : vector<8xf32> to vector<1x8xf32>
    %17 = vector.broadcast %16 : vector<1x8xf32> to vector<8x8xf32>
    %18 = arith.subf %5, %17 : vector<8x8xf32>
    %19 = math.exp %18 : vector<8x8xf32>
    %cst_5 = arith.constant dense<0.000000e+00> : vector<8xf32>
    %20 = vector.multi_reduction <add>, %19, %cst_5 [0] : vector<8x8xf32> to vector<8xf32>
    %21 = vector.shape_cast %20 : vector<8xf32> to vector<1x8xf32>
    %c0_6 = arith.constant 0 : index
    %c0_7 = arith.constant 0 : index
    %22 = vector.load %arg3[%c0_6, %c0_7] : memref<1x8xf32, #tpu.memory_space<vmem>>, vector<1x8xf32>
    %23 = arith.maximumf %22, %16 : vector<1x8xf32>
    %c0_8 = arith.constant 0 : index
    %c0_9 = arith.constant 0 : index
    %24 = vector.load %arg4[%c0_8, %c0_9] : memref<1x8xf32, #tpu.memory_space<vmem>>, vector<1x8xf32>
    %c0_10 = arith.constant 0 : index
    %c0_11 = arith.constant 0 : index
    %25 = vector.load %arg3[%c0_10, %c0_11] : memref<1x8xf32, #tpu.memory_space<vmem>>, vector<1x8xf32>
    %26 = arith.subf %25, %23 : vector<1x8xf32>
    %27 = math.exp %26 : vector<1x8xf32>
    %28 = arith.mulf %24, %27 : vector<1x8xf32>
    %29 = arith.subf %16, %23 : vector<1x8xf32>
    %30 = math.exp %29 : vector<1x8xf32>
    %31 = arith.mulf %21, %30 : vector<1x8xf32>
    %32 = arith.addf %28, %31 : vector<1x8xf32>
    %c0_12 = arith.constant 0 : index
    %c0_13 = arith.constant 0 : index
    %33 = vector.load %arg4[%c0_12, %c0_13] : memref<1x8xf32, #tpu.memory_space<vmem>>, vector<1x8xf32>
    tpu.vector_store %arg4[%c0_12, %c0_13], %32 {strides = array<i32>} : memref<1x8xf32, #tpu.memory_space<vmem>>, vector<1x8xf32>,
    %c0_14 = arith.constant 0 : index
    %c0_15 = arith.constant 0 : index
    %34 = vector.load %arg3[%c0_14, %c0_15] : memref<1x8xf32, #tpu.memory_space<vmem>>, vector<1x8xf32>
    tpu.vector_store %arg3[%c0_14, %c0_15], %23 {strides = array<i32>} : memref<1x8xf32, #tpu.memory_space<vmem>>, vector<1x8xf32>,
    %35 = tpu.iota {dimensions = array<i32: 0>} : vector<8x8xi32>
    %36 = tpu.iota {dimensions = array<i32: 1>} : vector<8x8xi32>
    %37 = arith.cmpi eq, %35, %36 : vector<8x8xi32>
    %cst_16 = arith.constant 0.000000e+00 : f32
    %38 = vector.broadcast %cst_16 : f32 to vector<8x8xf32>
    %39 = arith.select %37, %5, %38 : vector<8x8xi1>, vector<8x8xf32>
    %40 = vector.shape_cast %39 : vector<8x8xf32> to vector<1x8x8xf32>
    %cst_17 = arith.constant dense<0.000000e+00> : vector<1xf32>
    %41 = vector.multi_reduction <add>, %40, %cst_17 [1, 2] : vector<1x8x8xf32> to vector<1xf32>
    %42 = vector.shape_cast %41 : vector<1xf32> to vector<1x1x1xf32>
    %43 = vector.extract %42[0, 0, 0] : f32 from vector<1x1x1xf32>
    %44 = vector.broadcast %43 : f32 to vector<1x1xf32>
    %cst_18 = arith.constant 1.000000e+00 : f32
    %45 = vector.broadcast %cst_18 : f32 to vector<1x1xf32>
    %46 = arith.mulf %44, %45 : vector<1x1xf32>
    %47 = vector.shape_cast %14 : vector<8x1xf32> to vector<1x8x1xf32>
    %cst_19 = arith.constant dense<0.000000e+00> : vector<1xf32>
    %48 = vector.multi_reduction <add>, %47, %cst_19 [1, 2] : vector<1x8x1xf32> to vector<1xf32>
    %49 = vector.shape_cast %48 : vector<1xf32> to vector<1x1x1xf32>
    %50 = vector.extract %49[0, 0, 0] : f32 from vector<1x1x1xf32>
    %51 = vector.broadcast %50 : f32 to vector<1x1xf32>
    %cst_20 = arith.constant 5.000000e-01 : f32
    %52 = vector.broadcast %cst_20 : f32 to vector<1x1xf32>
    %53 = arith.mulf %52, %51 : vector<1x1xf32>
    %54 = arith.subf %53, %46 : vector<1x1xf32>
    %c0_21 = arith.constant 0 : index
    %55 = memref.load %arg5[%c0_21] : memref<1xf32, #tpu.memory_space<smem>>
    %56 = vector.extract %54[0, 0] : f32 from vector<1x1xf32>
    %57 = arith.addf %55, %56 : f32
    %c0_22 = arith.constant 0 : index
    %58 = memref.load %arg5[%c0_22] : memref<1xf32, #tpu.memory_space<smem>>
    memref.store %57, %arg5[%c0_22] : memref<1xf32, #tpu.memory_space<smem>>
    %c0_i32_23 = arith.constant 0 : i32
    %59 = arith.cmpi eq, %arg0, %c0_i32_23 : i32
    %60 = arith.extui %59 : i1 to i32
    %c0_i32_24 = arith.constant 0 : i32
    %61 = arith.cmpi ne, %60, %c0_i32_24 : i32
    scf.if %61 {
      %c0_25 = arith.constant 0 : index
      %c0_26 = arith.constant 0 : index
      %62 = vector.load %arg3[%c0_25, %c0_26] : memref<1x8xf32, #tpu.memory_space<vmem>>, vector<1x8xf32>
      %c0_27 = arith.constant 0 : index
      %c0_28 = arith.constant 0 : index
      %63 = vector.load %arg4[%c0_27, %c0_28] : memref<1x8xf32, #tpu.memory_space<vmem>>, vector<1x8xf32>
      %64 = math.log %63 : vector<1x8xf32>
      %65 = arith.addf %62, %64 : vector<1x8xf32>
      %c0_29 = arith.constant 0 : index
      %66 = memref.load %arg5[%c0_29] : memref<1xf32, #tpu.memory_space<smem>>
      %67 = vector.shape_cast %65 : vector<1x8xf32> to vector<1x1x8xf32>
      %cst_30 = arith.constant dense<0.000000e+00> : vector<1xf32>
      %68 = vector.multi_reduction <add>, %67, %cst_30 [1, 2] : vector<1x1x8xf32> to vector<1xf32>
      %69 = vector.shape_cast %68 : vector<1xf32> to vector<1x1x1xf32>
      %70 = vector.extract %69[0, 0, 0] : f32 from vector<1x1x1xf32>
      %71 = vector.broadcast %70 : f32 to vector<1x1xf32>
      %72 = vector.extract %71[0, 0] : f32 from vector<1x1xf32>
      %cst_31 = arith.constant 5.000000e-01 : f32
      %73 = arith.mulf %cst_31, %72 : f32
      %74 = arith.addf %66, %73 : f32
      %c0_32 = arith.constant 0 : index
      %c0_33 = arith.constant 0 : index
      %75 = memref.load %arg2[%c0_32, %c0_33] : memref<1x1xf32, #tpu.memory_space<smem>>
      memref.store %74, %arg2[%c0_32, %c0_33] : memref<1x1xf32, #tpu.memory_space<smem>>
    } else {
    }
    return
  }
  func.func @transform_0(%arg0: i32) -> (i32, i32) {
    %c0_i32 = arith.constant 0 : i32
    %c0_i32_0 = arith.constant 0 : i32
    return %arg0, %c0_i32 : i32, i32
  }
  func.func @transform_1(%arg0: i32) -> (i32, i32) {
    %c0_i32 = arith.constant 0 : i32
    %c0_i32_0 = arith.constant 0 : i32
    %c0_i32_1 = arith.constant 0 : i32
    return %c0_i32, %c0_i32_0 : i32, i32
  }
}

</mosaic_0001>

<llo_original>
// kernel: tpu_custom_call.1
$region0: #{tpu_custom_call.1}
  #allocation0 [shape = 'u32[]', space=smem, size = 0x4, offset = 0x4, fixed_abs, tag = 'smem constant byte address 0x4 - core index']
  #allocation1 [shape = 'u32[144,128]{1,0:T(1,128)}', space=vmem, size = 0x12000, scoped, tag = 'internal scratch']
  #allocation2 [shape = 'f32[1,8]{1,0:T(1,128)}', space=vmem, size = 0x200, scoped, tag = 'scratch operand']
  #allocation3 [shape = 'f32[1,8]{1,0:T(1,128)}', space=vmem, size = 0x200, scoped, tag = 'scratch operand']
  #allocation4 [shape = 'f32[1]{0:T(128)}', space=smem, size = 0x200, scoped, tag = 'scratch operand']
  %s0 = inlined_call_operand.hbm [shape: f32[8,8], index: 0, kind: input, shape index: {}]
  %s1 = inlined_call_operand.hbm [shape: f32[1,1], index: 1, kind: output, shape index: {}]
  %s2 = sld [smem:[#allocation0]]
  $region26: #{tpu_custom_call.1} parent=0
    _
  %s4 = ssub.s32 1, %s2
  %s5 = scalar_select 0, %s4, %s2
  $region1: #{tpu_custom_call.1} parent=0
    #allocation5 [shape = 'u8[4096]{0}', space=vmem, size = 0x1000, scoped, tag = 'input window, operand 0, single buffered']
    #allocation6 [shape = 's32[1]{0}', space=sflag, size = 0x4, scoped, tag = 'scoped memory for tpu_custom_call.1']
    #allocation7 [shape = 's32[1]{0}', space=sflag, size = 0x4, scoped, tag = 'scoped memory for tpu_custom_call.1']
    #allocation8 [shape = 'u8[512]{0}', space=smem, size = 0x200, scoped, tag = 'output window, operand 0, single buffered']
    %6 = vsyncpa [#allocation6], 0
    %7 = vsyncpa [#allocation7], 0
    // Predicated region
    $region2: #{tpu_custom_call.1} parent=1 // pred_check
      _
    $region3: #{tpu_custom_call.1} parent=1 // pred_check_branch
      %9 = sbr.rel (0) target = $region5
    $region4: #{tpu_custom_call.1} parent=1 // pred_region
      %s11 = ssub.s32 128, 128
      %12 = vsyncadd [#allocation6], %s11
      %s14 = sshll.u32 [#allocation5], 4
      %s15 = int_to_ptr.vmem [resolvable:$true] %s14
      %17 = dma.hbm_to_vmem [thread:$0]  %s0, 128, %s15, [#allocation6]
    $region5: #{tpu_custom_call.1} parent=1 // pred_fallthru
      _
    // Predicated region
    $region6: #{tpu_custom_call.1} parent=1 // pred_check
      _
    $region7: #{tpu_custom_call.1} parent=1 // pred_check_branch
      %19 = sbr.rel (0) target = $region9
    $region8: #{tpu_custom_call.1} parent=1 // pred_region
      %20 = dma.done [#allocation6], 128
    $region9: #{tpu_custom_call.1} parent=1 // pred_fallthru
      _
    %p21 = scmp.eq.s32.totalorder 0, 0
    // Predicated region
    $region10: #{tpu_custom_call.1} parent=1 // pred_check
      %p22 = pneg %p21
    $region11: #{tpu_custom_call.1} parent=1 // pred_check_branch
      %24 = sbr.rel (%p22) target = $region13
    $region12: #{tpu_custom_call.1} parent=1 // pred_region
      %vm25 = vcmask 57344
      %26 = vst.msk [vmem:[#allocation2] sm:$0x1] %vm25, -inf
      %27 = vst.msk [vmem:[#allocation3] sm:$0x1] %vm25, 0.0
      %s28 = scalar_lea.smem [#allocation4], 0
      %29 = sst [smem:[%s28]] 0.0
    $region13: #{tpu_custom_call.1} parent=1 // pred_fallthru
      _
    %v30 = vld [vmem:[#allocation5] sm:$0xff]
    %v31 = vmul.f32 %v30, 2.0
    %vm32 = vcmask 64512
    %v33 = vsel %vm32, %v31, -inf
    %34 = vmax.xlane.f32.xlu0 %v33
    %v35 = vpop.xlane.xlu0 %34
    %v36 = vsub.f32 %v31, %v35
    %v37 = vmul.f32 %v36, 1.442695
    %v38 = vpow.pop %v37
    %v39 = vsel %vm32, %v38, 0.0
    %40 = vadd.xlane.f32.xlu0 %v39
    %v41 = vpop.xlane.xlu0 %40
    %v42 = vlog2.pop %v41
    %v43 = vmul.f32 %v42, 0.6931472
    %v44 = vadd.f32 %v35, %v43
    %v45 = vrot.slane %v33, 4
    %v46 = vmax.f32 %v33, %v45
    %v47 = vrot.slane %v46, 2
    %v48 = vmax.f32 %v46, %v47
    %v49 = vrot.slane %v48, 1
    %v50 = vmax.f32 %v48, %v49
    %v51 = vsub.f32 %v31, %v50
    %v52 = vmul.f32 %v51, 1.442695
    %v53 = vpow.pop %v52
    %v54 = vsel %vm32, %v53, 0.0
    %v55 = vrot.slane %v54, 4
    %v56 = vadd.f32 %v54, %v55
    %v57 = vrot.slane %v56, 2
    %v58 = vadd.f32 %v56, %v57
    %v59 = vrot.slane %v58, 1
    %v60 = vadd.f32 %v58, %v59
    %v61 = vld [vmem:[#allocation2] sm:$0x1]
    %v62 = vmax.f32 %v61, %v50
    %v63 = vld [vmem:[#allocation3] sm:$0x1]
    %v64 = vsub.f32 %v61, %v62
    %v65 = vmul.f32 %v64, 1.442695
    %v66 = vpow.pop %v65
    %v67 = vmul.f32 %v63, %v66
    %v68 = vsub.f32 %v50, %v62
    %v69 = vmul.f32 %v68, 1.442695
    %v70 = vpow.pop %v69
    %v71 = vmul.f32 %v60, %v70
    %v72 = vadd.f32 %v67, %v71
    %vm73 = vcmask 57344
    %74 = vst.msk [vmem:[#allocation3] sm:$0x1] %vm73, %v72
    %75 = vst.msk [vmem:[#allocation2] sm:$0x1] %vm73, %v62
    %v76 = vlaneseq
    %v77 = vshrl.u32 %v76, 7
    %v78 = vlaneseq
    %v79 = vand.u32 %v78, 127
    %vm80 = vcmp.eq.s32.totalorder %v77, %v79
    %v81 = vsel %vm80, %v31, 0.0
    %v82 = vsel %vm32, %v81, 0.0
    %83 = vadd.xlane.f32.xlu0 %v82
    %v84 = vpop.xlane.xlu0 %83
    %v85 = vrot.slane %v84, 4
    %v86 = vadd.f32 %v84, %v85
    %v87 = vrot.slane %v86, 2
    %v88 = vadd.f32 %v86, %v87
    %v89 = vrot.slane %v88, 1
    %v90 = vadd.f32 %v88, %v89
    %s91 = vtos %v90
    %v92 = vstv %s91
    %vm93 = vcmask 7168
    %v94 = vsel %vm93, %v44, 0.0
    %95 = vadd.xlane.f32.xlu0 %v94
    %v96 = vpop.xlane.xlu0 %95
    %v97 = vrot.slane %v96, 4
    %v98 = vadd.f32 %v96, %v97
    %v99 = vrot.slane %v98, 2
    %v100 = vadd.f32 %v98, %v99
    %v101 = vrot.slane %v100, 1
    %v102 = vadd.f32 %v100, %v101
    %s103 = vtos %v102
    %v104 = vstv %s103
    %v105 = vmul.f32 %v104, 0.5
    %v106 = vsub.f32 %v105, %v92
    %s107 = sld [smem:[#allocation4]]
    %s108 = vtos %v106
    %s109 = sadd.f32 %s107, %s108
    %s110 = scalar_lea.smem [#allocation4], 0
    %111 = sst [smem:[%s110]] %s109
    // Predicated region
    $region14: #{tpu_custom_call.1} parent=1 // pred_check
      %p112 = pneg %p21
    $region15: #{tpu_custom_call.1} parent=1 // pred_check_branch
      %114 = sbr.rel (%p112) target = $region17
    $region16: #{tpu_custom_call.1} parent=1 // pred_region
      %v115 = vld [vmem:[#allocation2] sm:$0x1]
      %v116 = vld [vmem:[#allocation3] sm:$0x1]
      %v117 = vlog2.pop %v116
      %v118 = vmul.f32 %v117, 0.6931472
      %v119 = vadd.f32 %v115, %v118
      %s120 = sld [smem:[#allocation4]]
      %v121 = vsel %vm73, %v119, 0.0
      %122 = vadd.xlane.f32.xlu0 %v121
      %v123 = vpop.xlane.xlu0 %122
      %v124 = vrot.slane %v123, 4
      %v125 = vadd.f32 %v123, %v124
      %v126 = vrot.slane %v125, 2
      %v127 = vadd.f32 %v125, %v126
      %v128 = vrot.slane %v127, 1
      %v129 = vadd.f32 %v127, %v128
      %s130 = vtos %v129
      %s131 = smul.f32 %s130, 0.5
      %s132 = sadd.f32 %s120, %s131
      %s133 = scalar_lea.smem [#allocation8], 0
      %134 = sst [smem:[%s133]] %s132
    $region17: #{tpu_custom_call.1} parent=1 // pred_fallthru
      _
    // Predicated region
    $region18: #{tpu_custom_call.1} parent=1 // pred_check
      _
    $region19: #{tpu_custom_call.1} parent=1 // pred_check_branch
      %136 = sbr.rel (0) target = $region21
    $region20: #{tpu_custom_call.1} parent=1 // pred_region
      %s138 = ssub.s32 16, 16
      %139 = vsyncadd [#allocation7], %s138
      %142 = dma.smem_to_hbm [#allocation8], 16, %s1, [#allocation7]
    $region21: #{tpu_custom_call.1} parent=1 // pred_fallthru
      _
    // Predicated region
    $region22: #{tpu_custom_call.1} parent=1 // pred_check
      _
    $region23: #{tpu_custom_call.1} parent=1 // pred_check_branch
      %144 = sbr.rel (0) target = $region25
    $region24: #{tpu_custom_call.1} parent=1 // pred_region
      %145 = dma.done [#allocation7], 16
    $region25: #{tpu_custom_call.1} parent=1 // pred_fallthru
      _
    %146 = sfence
    %147 = vsyncpa [#allocation6], 1
    %148 = vsyncpa [#allocation7], 1

</llo_original>
